<compile_context>
chip_gen: v7x
topology: tpu7x:2x2x1
jax: 0.10.0
libtpu: 0.0.40
codegen_flags: <defaults>
</compile_context>

<pallas_src>
import functools
import math

import jax
import jax.numpy as jnp
from jax import lax
from jax.experimental import pallas as pl
from jax.experimental.pallas import tpu as pltpu

BN_EPS = 1e-5
_INV_SQRT2 = 1.0 / math.sqrt(2.0)


def _gelu(y, approximate):
    if approximate:
        # tanh approximation: transcendental runs on the EUP slot (v7x VPU relief).
        return jax.nn.gelu(y, approximate=True)
    # Matches torch.nn.functional.gelu default (erf-based).
    return 0.5 * y * (1.0 + lax.erf(y * jnp.float32(_INV_SQRT2)))


# ----------------------------------------------------------------------------
# Generation-aware VMEM sizing
# ----------------------------------------------------------------------------
def _vmem_capacity_bytes():
    try:
        info = pltpu.get_tpu_info()
        cap = getattr(info, "vmem_capacity_bytes", None)
        if cap is not None and int(cap) > 0:
            return int(cap)
    except Exception:
        pass
    return 64 * 1024 * 1024  # conservative default: v7x physical VMEM per TensorCore


def _vmem_limit_bytes():
    cap = _vmem_capacity_bytes()
    # ~48 MiB on v7x (64 MiB physical), ~96 MiB on v5e/v6e (128 MiB physical).
    return max(32 * 1024 * 1024, min((cap * 3) // 4, 96 * 1024 * 1024))


def _choose_l_tile(N, C, L, D, budget_bytes, max_tile=4096):
    """Pick (l_tile, l_padded): largest 128-multiple tile whose per-step working set
    fits the budget.  Prefers exact divisors of L; otherwise pads L up to a multiple
    so the grid never relies on implicit out-of-bounds behaviour."""

    def step_bytes(tl):
        x_tile = N * C * tl * 4
        out_tile = tl * N * D * 4
        y_tmp = tl * N * D * 4           # f32 matmul result / GELU temporary
        lhs_tmp = N * tl * C * 4         # transposed lhs (counted at f32)
        stats = 2 * C * tl * 4           # pass-1 lane-dense accumulators
        consts = 2 * (C * D + D) * 4
        return 2 * x_tile + 2 * out_tile + y_tmp + lhs_tmp + stats + consts

    if L <= 128:
        return L, L

    cap = (min(max(L, 128), max_tile) // 128) * 128
    # Largest 128-multiple divisor of L that fits the budget.
    t = cap
    while t >= 128:
        if L % t == 0 and step_bytes(t) <= budget_bytes:
            return t, L
        t -= 128
    # No suitable divisor: largest fitting 128-multiple, pad L up to a multiple.
    t = cap
    while t > 128 and step_bytes(t) > budget_bytes:
        t -= 128
    l_pad = ((L + t - 1) // t) * t
    return t, l_pad


# ----------------------------------------------------------------------------
# Pass 1: per-channel batch statistics (lane-dense accumulation) + fold BN into Linear
# ----------------------------------------------------------------------------
def _stats_fold_kernel(x_ref, gamma_ref, beta_ref, w_ref, b_ref,
                       w_eff_ref, b_eff_ref, sum_ref, sumsq_ref, *, inv_count):
    # x_ref:     (N, C, TL)  raw input tile in NCL layout
    # gamma_ref: (C, 1), beta_ref: (C, 1)      BatchNorm affine
    # w_ref:     (C, D), b_ref: (1, D)         Linear parameters
    # w_eff_ref: (C, D) [compute dtype], b_eff_ref: (1, D) f32  -> BN folded into Linear
    # sum_ref, sumsq_ref: (C, TL) f32 lane-dense accumulators (VMEM scratch)
    t = pl.program_id(0)

    @pl.when(t == 0)
    def _init():
        sum_ref[...] = jnp.zeros_like(sum_ref)
        sumsq_ref[...] = jnp.zeros_like(sumsq_ref)

    x = x_ref[...]                            # (N, C, TL)
    # VPU-only per-step work: reduce over the batch dim, keep lanes dense.
    sum_ref[...] += jnp.sum(x, axis=0)        # (C, TL)
    sumsq_ref[...] += jnp.sum(x * x, axis=0)  # (C, TL)

    @pl.when(t == pl.num_programs(0) - 1)
    def _finalize():
        # Single cross-lane (XLU) reduction at the end of the grid.
        mean = jnp.sum(sum_ref[...], axis=1, keepdims=True) * inv_count       # (C, 1)
        ex2 = jnp.sum(sumsq_ref[...], axis=1, keepdims=True) * inv_count      # (C, 1)
        var = jnp.maximum(ex2 - mean * mean, 0.0)                             # biased var
        scale = gamma_ref[...] * lax.rsqrt(var + BN_EPS)                      # (C, 1)
        shift = beta_ref[...] - mean * scale                                  # (C, 1)
        w = w_ref[...]                                                        # (C, D)
        # y = (x*scale + shift) @ w + b  ==  x @ (scale*w) + (shift @ w + b)
        w_eff_ref[...] = (w * scale).astype(w_eff_ref.dtype)
        b_eff_ref[...] = b_ref[...] + jnp.sum(w * shift, axis=0, keepdims=True)


# ----------------------------------------------------------------------------
# Pass 2: y = x @ w_eff + b_eff, GELU; output written as lane-dense (L, N*D) slabs
# ----------------------------------------------------------------------------
def _apply_kernel(x_ref, w_eff_ref, b_eff_ref, o_ref, *, approximate_gelu):
    # x_ref: (N, C, TL) f32   w_eff_ref: (C, D) compute dtype   b_eff_ref: (1, D) f32
    # o_ref: (TL, N*D) — batch n occupies lanes [n*D, (n+1)*D)
    x = x_ref[...]
    n_batch, _, tl = x.shape
    w = w_eff_ref[...]
    d = w.shape[1]
    b = b_eff_ref[...]

    # One batched MXU matmul per tile: rows are (n, t) in n-major order.
    lhs = jnp.concatenate([x[n].T for n in range(n_batch)], axis=0)   # (N*TL, C)
    y = jnp.dot(lhs.astype(w.dtype), w, preferred_element_type=jnp.float32) + b
    y = _gelu(y, approximate_gelu)

    # Contiguous, 128-lane-aligned (unmasked) stores per batch slab.
    for n in range(n_batch):
        o_ref[:, n * d:(n + 1) * d] = y[n * tl:(n + 1) * tl, :].astype(o_ref.dtype)


# ----------------------------------------------------------------------------
# Wrapper
# ----------------------------------------------------------------------------
def embed_forward(x_ncl, gamma, beta, w_cd, b_d, *, l_tile=None,
                  compute_dtype=jnp.bfloat16, approximate_gelu=False,
                  out_dtype=None):
    """BatchNorm1d (training batch stats) -> permute(2,0,1) -> Linear -> GELU.

    x_ncl: (N, C, L) float32  (batch, input_dim, seq) — PyTorch BatchNorm1d layout.
    gamma, beta: (C,) BN affine.   w_cd: (C, D) = torch Linear weight transposed.
    b_d: (D,) Linear bias.         Returns (L, N, D).
    """
    N, C, L = x_ncl.shape
    D = w_cd.shape[1]
    out_dtype = x_ncl.dtype if out_dtype is None else out_dtype

    vmem_limit = _vmem_limit_bytes()
    budget = int(vmem_limit * 0.6)      # headroom for compiler temporaries
    if l_tile is None:
        l_tile, l_pad = _choose_l_tile(N, C, L, D, budget)
    else:
        l_pad = ((L + l_tile - 1) // l_tile) * l_tile
    num_tiles = l_pad // l_tile

    x32 = x_ncl.astype(jnp.float32)
    if l_pad != L:
        # Zero padding contributes nothing to sum / sum-of-squares, so batch stats
        # (normalized by the true N*L) remain exact; padded output rows are sliced off.
        x32 = jnp.pad(x32, ((0, 0), (0, 0), (0, l_pad - L)))

    gamma_c1 = gamma.reshape(C, 1).astype(jnp.float32)
    beta_c1 = beta.reshape(C, 1).astype(jnp.float32)
    w32 = w_cd.astype(jnp.float32)
    b_1d = b_d.reshape(1, D).astype(jnp.float32)

    # ---- Pass 1: stats over all (N, L) positions, fold BN affine into the Linear ----
    w_eff, b_eff = pl.pallas_call(
        functools.partial(_stats_fold_kernel, inv_count=1.0 / float(N * L)),
        grid=(num_tiles,),
        in_specs=[
            pl.BlockSpec((N, C, l_tile), lambda t: (0, 0, t)),
            pl.BlockSpec((C, 1), lambda t: (0, 0)),
            pl.BlockSpec((C, 1), lambda t: (0, 0)),
            pl.BlockSpec((C, D), lambda t: (0, 0)),
            pl.BlockSpec((1, D), lambda t: (0, 0)),
        ],
        out_specs=[
            pl.BlockSpec((C, D), lambda t: (0, 0)),
            pl.BlockSpec((1, D), lambda t: (0, 0)),
        ],
        out_shape=[
            jax.ShapeDtypeStruct((C, D), compute_dtype),   # folded weight, MXU dtype
            jax.ShapeDtypeStruct((1, D), jnp.float32),     # folded bias stays f32
        ],
        scratch_shapes=[
            pltpu.VMEM((C, l_tile), jnp.float32),
            pltpu.VMEM((C, l_tile), jnp.float32),
        ],
        compiler_params=pltpu.CompilerParams(
            dimension_semantics=("arbitrary",),            # running reduction over tiles
            vmem_limit_bytes=vmem_limit,
        ),
    )(x32, gamma_c1, beta_c1, w32, b_1d)

    # ---- Pass 2: one batched matmul + bias + GELU per tile, lane-dense output ----
    out2d = pl.pallas_call(
        functools.partial(_apply_kernel, approximate_gelu=approximate_gelu),
        grid=(num_tiles,),
        in_specs=[
            pl.BlockSpec((N, C, l_tile), lambda t: (0, 0, t)),
            pl.BlockSpec((C, D), lambda t: (0, 0)),
            pl.BlockSpec((1, D), lambda t: (0, 0)),
        ],
        out_specs=pl.BlockSpec((l_tile, N * D), lambda t: (t, 0)),
        out_shape=jax.ShapeDtypeStruct((l_pad, N * D), out_dtype),
        compiler_params=pltpu.CompilerParams(
            dimension_semantics=("parallel",),             # independent tiles -> both TCs
            vmem_limit_bytes=vmem_limit,
        ),
    )(x32, w_eff, b_eff)

    if l_pad != L:
        out2d = out2d[:L]
    # Free reshape: (L, N*D) row-major is exactly (L, N, D) row-major.
    return out2d.reshape(L, N, D)


def reference_forward(x_ncl, gamma, beta, w_cd, b_d):
    N, C, L = x_ncl.shape
    mean = jnp.mean(x_ncl, axis=(0, 2), keepdims=True)
    var = jnp.mean((x_ncl - mean) ** 2, axis=(0, 2), keepdims=True)
    x_hat = (x_ncl - mean) / jnp.sqrt(var + BN_EPS)
    x_hat = x_hat * gamma.reshape(1, C, 1) + beta.reshape(1, C, 1)
    x_perm = jnp.transpose(x_hat, (2, 0, 1))  # (L, N, C)
    y = jnp.einsum("lnc,cd->lnd", x_perm, w_cd) + b_d
    return jax.nn.gelu(y, approximate=False)


if __name__ == "__main__":
    # Small shapes consistent with the module: batch N=4, input_dim C=16,
    # sequence length L=512, output_dim D=128 (lane-dense output).
    N, C, L, D = 4, 16, 512, 128

    key = jax.random.PRNGKey(0)
    kx, kw, kb, kg, kbe, kx2 = jax.random.split(key, 6)

    x = jax.random.normal(kx, (N, C, L), dtype=jnp.float32)
    gamma = 1.0 + 0.1 * jax.random.normal(kg, (C,), dtype=jnp.float32)
    beta = 0.1 * jax.random.normal(kbe, (C,), dtype=jnp.float32)
    w_cd = 0.02 * jax.random.normal(kw, (C, D), dtype=jnp.float32)  # (in, out) = torch weight.T
    b_d = 0.02 * jax.random.normal(kb, (D,), dtype=jnp.float32)

    ref = reference_forward(x, gamma, beta, w_cd, b_d)

    # 1) Production path: auto-chosen (large) tile, bf16 MXU operands, f32 accumulation.
    out = jax.block_until_ready(embed_forward(x, gamma, beta, w_cd, b_d))
    assert out.shape == (L, N, D)
    err = float(jnp.max(jnp.abs(out - ref)))
    assert err < 5e-3, f"bf16 path max abs error {err}"

    # 2) Forced multi-tile grid (exercises cross-tile stats accumulation) with f32
    #    MXU operands: tight exactness check on the BN-folding math.
    out32 = jax.block_until_ready(
        embed_forward(x, gamma, beta, w_cd, b_d, l_tile=128,
                      compute_dtype=jnp.float32))
    err32 = float(jnp.max(jnp.abs(out32 - ref)))
    assert err32 < 2e-4, f"f32 path max abs error {err32}"

    # 3) Non-divisible sequence length: exercises the padded-tail path.
    L3 = 320
    x3 = jax.random.normal(kx2, (N, C, L3), dtype=jnp.float32)
    ref3 = reference_forward(x3, gamma, beta, w_cd, b_d)
    out3 = jax.block_until_ready(
        embed_forward(x3, gamma, beta, w_cd, b_d, l_tile=128))
    assert out3.shape == (L3, N, D)
    err3 = float(jnp.max(jnp.abs(out3 - ref3)))
    assert err3 < 5e-3, f"padded path max abs error {err3}"

    print("KERNEL_OK")
</pallas_src>

<mosaic_0001>
module attributes {stable_mosaic.version = 11 : i64} {
  func.func @_stats_fold_kernel(%arg0: i32, %arg1: memref<4x16x512xf32, #tpu.memory_space<vmem>>, %arg2: memref<16x1xf32, #tpu.memory_space<vmem>>, %arg3: memref<16x1xf32, #tpu.memory_space<vmem>>, %arg4: memref<16x128xf32, #tpu.memory_space<vmem>>, %arg5: memref<1x128xf32, #tpu.memory_space<vmem>>, %arg6: memref<16x128xbf16, #tpu.memory_space<vmem>>, %arg7: memref<1x128xf32, #tpu.memory_space<vmem>>, %arg8: memref<16x512xf32, #tpu.memory_space<vmem>>, %arg9: memref<16x512xf32, #tpu.memory_space<vmem>>) attributes {dimension_semantics = [#tpu.dimension_semantics<arbitrary>], iteration_bounds = array<i64: 1>, scalar_prefetch = 0 : i64, scratch_operands = 2 : i64, tpu.core_type = #tpu.core_type<tc>, window_params = [{transform_indices = @transform_0, window_bounds = array<i64: 4, 16, 512>}, {pipeline_mode = #tpu.pipeline_mode<synchronous>, transform_indices = @transform_1, window_bounds = array<i64: 16, 1>}, {pipeline_mode = #tpu.pipeline_mode<synchronous>, transform_indices = @transform_2, window_bounds = array<i64: 16, 1>}, {pipeline_mode = #tpu.pipeline_mode<synchronous>, transform_indices = @transform_3, window_bounds = array<i64: 16, 128>}, {pipeline_mode = #tpu.pipeline_mode<synchronous>, transform_indices = @transform_4, window_bounds = array<i64: 1, 128>}, {pipeline_mode = #tpu.pipeline_mode<synchronous>, transform_indices = @transform_5, window_bounds = array<i64: 16, 128>}, {pipeline_mode = #tpu.pipeline_mode<synchronous>, transform_indices = @transform_6, window_bounds = array<i64: 1, 128>}]} {
    %c0_i32 = arith.constant 0 : i32
    %0 = arith.cmpi eq, %arg0, %c0_i32 : i32
    %1 = arith.extui %0 : i1 to i32
    %c0_i32_0 = arith.constant 0 : i32
    %2 = arith.cmpi ne, %1, %c0_i32_0 : i32
    scf.if %2 {
      %cst_14 = arith.constant 0.000000e+00 : f32
      %16 = vector.broadcast %cst_14 : f32 to vector<16x512xf32>
      %c0_15 = arith.constant 0 : index
      %c0_16 = arith.constant 0 : index
      %17 = vector.load %arg8[%c0_15, %c0_16] : memref<16x512xf32, #tpu.memory_space<vmem>>, vector<16x512xf32>
      tpu.vector_store %arg8[%c0_15, %c0_16], %16 {strides = array<i32>} : memref<16x512xf32, #tpu.memory_space<vmem>>, vector<16x512xf32>,
      %cst_17 = arith.constant 0.000000e+00 : f32
      %18 = vector.broadcast %cst_17 : f32 to vector<16x512xf32>
      %c0_18 = arith.constant 0 : index
      %c0_19 = arith.constant 0 : index
      %19 = vector.load %arg9[%c0_18, %c0_19] : memref<16x512xf32, #tpu.memory_space<vmem>>, vector<16x512xf32>
      tpu.vector_store %arg9[%c0_18, %c0_19], %18 {strides = array<i32>} : memref<16x512xf32, #tpu.memory_space<vmem>>, vector<16x512xf32>,
    } else {
    }
    %c0 = arith.constant 0 : index
    %c0_1 = arith.constant 0 : index
    %c0_2 = arith.constant 0 : index
    %3 = vector.load %arg1[%c0, %c0_1, %c0_2] : memref<4x16x512xf32, #tpu.memory_space<vmem>>, vector<4x16x512xf32>
    %c0_3 = arith.constant 0 : index
    %c0_4 = arith.constant 0 : index
    %4 = vector.load %arg8[%c0_3, %c0_4] : memref<16x512xf32, #tpu.memory_space<vmem>>, vector<16x512xf32>
    %cst = arith.constant dense<0.000000e+00> : vector<16x512xf32>
    %5 = vector.multi_reduction <add>, %3, %cst [0] : vector<4x16x512xf32> to vector<16x512xf32>
    %6 = arith.addf %4, %5 : vector<16x512xf32>
    %c0_5 = arith.constant 0 : index
    %c0_6 = arith.constant 0 : index
    %7 = vector.load %arg8[%c0_5, %c0_6] : memref<16x512xf32, #tpu.memory_space<vmem>>, vector<16x512xf32>
    tpu.vector_store %arg8[%c0_5, %c0_6], %6 {strides = array<i32>} : memref<16x512xf32, #tpu.memory_space<vmem>>, vector<16x512xf32>,
    %c0_7 = arith.constant 0 : index
    %c0_8 = arith.constant 0 : index
    %8 = vector.load %arg9[%c0_7, %c0_8] : memref<16x512xf32, #tpu.memory_space<vmem>>, vector<16x512xf32>
    %9 = arith.mulf %3, %3 : vector<4x16x512xf32>
    %cst_9 = arith.constant dense<0.000000e+00> : vector<16x512xf32>
    %10 = vector.multi_reduction <add>, %9, %cst_9 [0] : vector<4x16x512xf32> to vector<16x512xf32>
    %11 = arith.addf %8, %10 : vector<16x512xf32>
    %c0_10 = arith.constant 0 : index
    %c0_11 = arith.constant 0 : index
    %12 = vector.load %arg9[%c0_10, %c0_11] : memref<16x512xf32, #tpu.memory_space<vmem>>, vector<16x512xf32>
    tpu.vector_store %arg9[%c0_10, %c0_11], %11 {strides = array<i32>} : memref<16x512xf32, #tpu.memory_space<vmem>>, vector<16x512xf32>,
    %c0_i32_12 = arith.constant 0 : i32
    %13 = arith.cmpi eq, %arg0, %c0_i32_12 : i32
    %14 = arith.extui %13 : i1 to i32
    %c0_i32_13 = arith.constant 0 : i32
    %15 = arith.cmpi ne, %14, %c0_i32_13 : i32
    scf.if %15 {
      %c0_14 = arith.constant 0 : index
      %c0_15 = arith.constant 0 : index
      %16 = vector.load %arg8[%c0_14, %c0_15] : memref<16x512xf32, #tpu.memory_space<vmem>>, vector<16x512xf32>
      %cst_16 = arith.constant dense<0.000000e+00> : vector<16xf32>
      %17 = vector.multi_reduction <add>, %16, %cst_16 [1] : vector<16x512xf32> to vector<16xf32>
      %18 = vector.shape_cast %17 : vector<16xf32> to vector<16x1xf32>
      %cst_17 = arith.constant 4.8828125E-4 : f32
      %19 = vector.broadcast %cst_17 : f32 to vector<16x1xf32>
      %20 = arith.mulf %18, %19 : vector<16x1xf32>
      %c0_18 = arith.constant 0 : index
      %c0_19 = arith.constant 0 : index
      %21 = vector.load %arg9[%c0_18, %c0_19] : memref<16x512xf32, #tpu.memory_space<vmem>>, vector<16x512xf32>
      %cst_20 = arith.constant dense<0.000000e+00> : vector<16xf32>
      %22 = vector.multi_reduction <add>, %21, %cst_20 [1] : vector<16x512xf32> to vector<16xf32>
      %23 = vector.shape_cast %22 : vector<16xf32> to vector<16x1xf32>
      %cst_21 = arith.constant 4.8828125E-4 : f32
      %24 = vector.broadcast %cst_21 : f32 to vector<16x1xf32>
      %25 = arith.mulf %23, %24 : vector<16x1xf32>
      %26 = arith.mulf %20, %20 : vector<16x1xf32>
      %27 = arith.subf %25, %26 : vector<16x1xf32>
      %cst_22 = arith.constant 0.000000e+00 : f32
      %28 = vector.broadcast %cst_22 : f32 to vector<16x1xf32>
      %29 = arith.maximumf %27, %28 : vector<16x1xf32>
      %c0_23 = arith.constant 0 : index
      %c0_24 = arith.constant 0 : index
      %30 = vector.load %arg2[%c0_23, %c0_24] : memref<16x1xf32, #tpu.memory_space<vmem>>, vector<16x1xf32>
      %cst_25 = arith.constant 9.99999974E-6 : f32
      %31 = vector.broadcast %cst_25 : f32 to vector<16x1xf32>
      %32 = arith.addf %29, %31 : vector<16x1xf32>
      %33 = math.rsqrt %32 : vector<16x1xf32>
      %34 = arith.mulf %30, %33 : vector<16x1xf32>
      %c0_26 = arith.constant 0 : index
      %c0_27 = arith.constant 0 : index
      %35 = vector.load %arg3[%c0_26, %c0_27] : memref<16x1xf32, #tpu.memory_space<vmem>>, vector<16x1xf32>
      %36 = arith.mulf %20, %34 : vector<16x1xf32>
      %37 = arith.subf %35, %36 : vector<16x1xf32>
      %c0_28 = arith.constant 0 : index
      %c0_29 = arith.constant 0 : index
      %38 = vector.load %arg4[%c0_28, %c0_29] : memref<16x128xf32, #tpu.memory_space<vmem>>, vector<16x128xf32>
      %39 = vector.broadcast %34 : vector<16x1xf32> to vector<16x128xf32>
      %40 = arith.mulf %38, %39 : vector<16x128xf32>
      %41 = arith.truncf %40 : vector<16x128xf32> to vector<16x128xbf16>
      %c0_30 = arith.constant 0 : index
      %c0_31 = arith.constant 0 : index
      %42 = vector.load %arg6[%c0_30, %c0_31] : memref<16x128xbf16, #tpu.memory_space<vmem>>, vector<16x128xbf16>
      tpu.vector_store %arg6[%c0_30, %c0_31], %41 {strides = array<i32>} : memref<16x128xbf16, #tpu.memory_space<vmem>>, vector<16x128xbf16>,
      %c0_32 = arith.constant 0 : index
      %c0_33 = arith.constant 0 : index
      %43 = vector.load %arg5[%c0_32, %c0_33] : memref<1x128xf32, #tpu.memory_space<vmem>>, vector<1x128xf32>
      %44 = vector.broadcast %37 : vector<16x1xf32> to vector<16x128xf32>
      %45 = arith.mulf %38, %44 : vector<16x128xf32>
      %cst_34 = arith.constant dense<0.000000e+00> : vector<128xf32>
      %46 = vector.multi_reduction <add>, %45, %cst_34 [0] : vector<16x128xf32> to vector<128xf32>
      %47 = vector.shape_cast %46 : vector<128xf32> to vector<1x128xf32>
      %48 = arith.addf %43, %47 : vector<1x128xf32>
      %c0_35 = arith.constant 0 : index
      %c0_36 = arith.constant 0 : index
      %49 = vector.load %arg7[%c0_35, %c0_36] : memref<1x128xf32, #tpu.memory_space<vmem>>, vector<1x128xf32>
      tpu.vector_store %arg7[%c0_35, %c0_36], %48 {strides = array<i32>} : memref<1x128xf32, #tpu.memory_space<vmem>>, vector<1x128xf32>,
    } else {
    }
    return
  }
  func.func @transform_0(%arg0: i32) -> (i32, i32, i32) {
    %c0_i32 = arith.constant 0 : i32
    %c0_i32_0 = arith.constant 0 : i32
    %c0_i32_1 = arith.constant 0 : i32
    return %c0_i32, %c0_i32_0, %arg0 : i32, i32, i32
  }
  func.func @transform_1(%arg0: i32) -> (i32, i32) {
    %c0_i32 = arith.constant 0 : i32
    %c0_i32_0 = arith.constant 0 : i32
    %c0_i32_1 = arith.constant 0 : i32
    return %c0_i32, %c0_i32_0 : i32, i32
  }
  func.func @transform_2(%arg0: i32) -> (i32, i32) {
    %c0_i32 = arith.constant 0 : i32
    %c0_i32_0 = arith.constant 0 : i32
    %c0_i32_1 = arith.constant 0 : i32
    return %c0_i32, %c0_i32_0 : i32, i32
  }
  func.func @transform_3(%arg0: i32) -> (i32, i32) {
    %c0_i32 = arith.constant 0 : i32
    %c0_i32_0 = arith.constant 0 : i32
    %c0_i32_1 = arith.constant 0 : i32
    return %c0_i32, %c0_i32_0 : i32, i32
  }
  func.func @transform_4(%arg0: i32) -> (i32, i32) {
    %c0_i32 = arith.constant 0 : i32
    %c0_i32_0 = arith.constant 0 : i32
    %c0_i32_1 = arith.constant 0 : i32
    return %c0_i32, %c0_i32_0 : i32, i32
  }
  func.func @transform_5(%arg0: i32) -> (i32, i32) {
    %c0_i32 = arith.constant 0 : i32
    %c0_i32_0 = arith.constant 0 : i32
    %c0_i32_1 = arith.constant 0 : i32
    return %c0_i32, %c0_i32_0 : i32, i32
  }
  func.func @transform_6(%arg0: i32) -> (i32, i32) {
    %c0_i32 = arith.constant 0 : i32
    %c0_i32_0 = arith.constant 0 : i32
    %c0_i32_1 = arith.constant 0 : i32
    return %c0_i32, %c0_i32_0 : i32, i32
  }
}

</mosaic_0001>

<llo_original>
// kernel: tpu_custom_call.1
$region0: #{tpu_custom_call.1}
  #allocation0 [shape = 'u32[]', space=smem, size = 0x4, offset = 0x4, fixed_abs, tag = 'smem constant byte address 0x4 - core index']
  #allocation1 [shape = 'u32[144,128]{1,0:T(1,128)}', space=vmem, size = 0x12000, scoped, tag = 'internal scratch']
  #allocation2 [shape = 'f32[16,512]{1,0:T(8,128)}', space=vmem, size = 0x8000, scoped, tag = 'scratch operand']
  #allocation3 [shape = 'f32[16,512]{1,0:T(8,128)}', space=vmem, size = 0x8000, scoped, tag = 'scratch operand']
  %s0 = inlined_call_operand.hbm [shape: f32[4,16,512], index: 0, kind: input, shape index: {}]
  %s1 = inlined_call_operand.vmem [shape: f32[16,1], index: 1, kind: input, shape index: {}]
  %s2 = inlined_call_operand.vmem [shape: f32[16,1], index: 2, kind: input, shape index: {}]
  %s3 = inlined_call_operand.vmem [shape: f32[16,128], index: 3, kind: input, shape index: {}]
  %s4 = inlined_call_operand.vmem [shape: f32[1,128], index: 4, kind: input, shape index: {}]
  %s5 = inlined_call_operand.hbm [shape: bf16[16,128], index: 5, kind: output, shape index: {0}]
  %s6 = inlined_call_operand.hbm [shape: f32[1,128], index: 6, kind: output, shape index: {1}]
  %7 = xla_tuple %s5, %s6
  %s8 = sld [smem:[#allocation0]]
  $region50: #{tpu_custom_call.1} parent=0
    _
  %s10 = ssub.s32 1, %s8
  %s11 = scalar_select 0, %s10, %s8
  $region1: #{tpu_custom_call.1} parent=0
    #allocation4 [shape = 'u8[131072]{0}', space=vmem, size = 0x20000, scoped, tag = 'input window, operand 0, single buffered']
    #allocation5 [shape = 's32[1]{0}', space=sflag, size = 0x4, scoped, tag = 'scoped memory for tpu_custom_call.1']
    #allocation6 [shape = 's32[1]{0}', space=sflag, size = 0x4, scoped, tag = 'scoped memory for tpu_custom_call.1']
    #allocation7 [shape = 'u8[4096]{0}', space=vmem, size = 0x1000, scoped, tag = 'output window, operand 0, single buffered']
    #allocation8 [shape = 'u8[512]{0}', space=vmem, size = 0x400, scoped, tag = 'output window, operand 1, single buffered']
    #allocation9 [shape = 's32[1]{0}', space=sflag, size = 0x4, scoped, tag = 'scoped memory for tpu_custom_call.1']
    %12 = vsyncpa [#allocation5], 0
    %13 = vsyncpa [#allocation6], 0
    %14 = vsyncpa [#allocation9], 0
    // Predicated region
    $region2: #{tpu_custom_call.1} parent=1 // pred_check
      _
    $region3: #{tpu_custom_call.1} parent=1 // pred_check_branch
      %16 = sbr.rel (0) target = $region5
    $region4: #{tpu_custom_call.1} parent=1 // pred_region
      %s18 = ssub.s32 4096, 4096
      %19 = vsyncadd [#allocation5], %s18
      %s20 = sshll.u32 [#allocation4], 4
      %s21 = int_to_ptr.vmem [resolvable:$true] %s20
      %26 = dma.hbm_to_vmem [thread:$0]  %s0, 4096, %s21, [#allocation5], 512, 512, 32
    $region5: #{tpu_custom_call.1} parent=1 // pred_fallthru
      _
    // Predicated region
    $region6: #{tpu_custom_call.1} parent=1 // pred_check
      _
    $region7: #{tpu_custom_call.1} parent=1 // pred_check_branch
      %28 = sbr.rel (0) target = $region9
    $region8: #{tpu_custom_call.1} parent=1 // pred_region
      _
    $region9: #{tpu_custom_call.1} parent=1 // pred_fallthru
      _
    // Predicated region
    $region10: #{tpu_custom_call.1} parent=1 // pred_check
      _
    $region11: #{tpu_custom_call.1} parent=1 // pred_check_branch
      %30 = sbr.rel (0) target = $region13
    $region12: #{tpu_custom_call.1} parent=1 // pred_region
      _
    $region13: #{tpu_custom_call.1} parent=1 // pred_fallthru
      _
    // Predicated region
    $region14: #{tpu_custom_call.1} parent=1 // pred_check
      _
    $region15: #{tpu_custom_call.1} parent=1 // pred_check_branch
      %32 = sbr.rel (0) target = $region17
    $region16: #{tpu_custom_call.1} parent=1 // pred_region
      _
    $region17: #{tpu_custom_call.1} parent=1 // pred_fallthru
      _
    // Predicated region
    $region18: #{tpu_custom_call.1} parent=1 // pred_check
      _
    $region19: #{tpu_custom_call.1} parent=1 // pred_check_branch
      %34 = sbr.rel (0) target = $region21
    $region20: #{tpu_custom_call.1} parent=1 // pred_region
      _
    $region21: #{tpu_custom_call.1} parent=1 // pred_fallthru
      _
    // Predicated region
    $region22: #{tpu_custom_call.1} parent=1 // pred_check
      _
    $region23: #{tpu_custom_call.1} parent=1 // pred_check_branch
      %36 = sbr.rel (0) target = $region25
    $region24: #{tpu_custom_call.1} parent=1 // pred_region
      %37 = dma.done [#allocation5], 4096
    $region25: #{tpu_custom_call.1} parent=1 // pred_fallthru
      _
    %p38 = scmp.eq.s32.totalorder 0, 0
    // Predicated region
    $region26: #{tpu_custom_call.1} parent=1 // pred_check
      %p39 = pneg %p38
    $region27: #{tpu_custom_call.1} parent=1 // pred_check_branch
      %41 = sbr.rel (%p39) target = $region29
    $region28: #{tpu_custom_call.1} parent=1 // pred_region
      %42 = vst [vmem:[#allocation2] sm:$0xff] 0.0
      %43 = vst [vmem:[#allocation2 + $0x8] sm:$0xff] 0.0
      %44 = vst [vmem:[#allocation2 + $0x10] sm:$0xff] 0.0
      %45 = vst [vmem:[#allocation2 + $0x18] sm:$0xff] 0.0
      %46 = vst [vmem:[#allocation2 + $0x20] sm:$0xff] 0.0
      %47 = vst [vmem:[#allocation2 + $0x28] sm:$0xff] 0.0
      %48 = vst [vmem:[#allocation2 + $0x30] sm:$0xff] 0.0
      %49 = vst [vmem:[#allocation2 + $0x38] sm:$0xff] 0.0
      %50 = vst [vmem:[#allocation3] sm:$0xff] 0.0
      %51 = vst [vmem:[#allocation3 + $0x8] sm:$0xff] 0.0
      %52 = vst [vmem:[#allocation3 + $0x10] sm:$0xff] 0.0
      %53 = vst [vmem:[#allocation3 + $0x18] sm:$0xff] 0.0
      %54 = vst [vmem:[#allocation3 + $0x20] sm:$0xff] 0.0
      %55 = vst [vmem:[#allocation3 + $0x28] sm:$0xff] 0.0
      %56 = vst [vmem:[#allocation3 + $0x30] sm:$0xff] 0.0
      %57 = vst [vmem:[#allocation3 + $0x38] sm:$0xff] 0.0
    $region29: #{tpu_custom_call.1} parent=1 // pred_fallthru
      _
    %v58 = vld [vmem:[#allocation4] sm:$0xff]
    %v59 = vld [vmem:[#allocation4 + $0x8] sm:$0xff]
    %v60 = vld [vmem:[#allocation4 + $0x10] sm:$0xff]
    %v61 = vld [vmem:[#allocation4 + $0x18] sm:$0xff]
    %v62 = vld [vmem:[#allocation4 + $0x20] sm:$0xff]
    %v63 = vld [vmem:[#allocation4 + $0x28] sm:$0xff]
    %v64 = vld [vmem:[#allocation4 + $0x30] sm:$0xff]
    %v65 = vld [vmem:[#allocation4 + $0x38] sm:$0xff]
    %v66 = vld [vmem:[#allocation4 + $0x40] sm:$0xff]
    %v67 = vld [vmem:[#allocation4 + $0x48] sm:$0xff]
    %v68 = vld [vmem:[#allocation4 + $0x50] sm:$0xff]
    %v69 = vld [vmem:[#allocation4 + $0x58] sm:$0xff]
    %v70 = vld [vmem:[#allocation4 + $0x60] sm:$0xff]
    %v71 = vld [vmem:[#allocation4 + $0x68] sm:$0xff]
    %v72 = vld [vmem:[#allocation4 + $0x70] sm:$0xff]
    %v73 = vld [vmem:[#allocation4 + $0x78] sm:$0xff]
    %v74 = vld [vmem:[#allocation4 + $0x80] sm:$0xff]
    %v75 = vld [vmem:[#allocation4 + $0x88] sm:$0xff]
    %v76 = vld [vmem:[#allocation4 + $0x90] sm:$0xff]
    %v77 = vld [vmem:[#allocation4 + $0x98] sm:$0xff]
    %v78 = vld [vmem:[#allocation4 + $0xa0] sm:$0xff]
    %v79 = vld [vmem:[#allocation4 + $0xa8] sm:$0xff]
    %v80 = vld [vmem:[#allocation4 + $0xb0] sm:$0xff]
    %v81 = vld [vmem:[#allocation4 + $0xb8] sm:$0xff]
    %v82 = vld [vmem:[#allocation4 + $0xc0] sm:$0xff]
    %v83 = vld [vmem:[#allocation4 + $0xc8] sm:$0xff]
    %v84 = vld [vmem:[#allocation4 + $0xd0] sm:$0xff]
    %v85 = vld [vmem:[#allocation4 + $0xd8] sm:$0xff]
    %v86 = vld [vmem:[#allocation4 + $0xe0] sm:$0xff]
    %v87 = vld [vmem:[#allocation4 + $0xe8] sm:$0xff]
    %v88 = vld [vmem:[#allocation4 + $0xf0] sm:$0xff]
    %v89 = vld [vmem:[#allocation4 + $0xf8] sm:$0xff]
    %v90 = vld [vmem:[#allocation2] sm:$0xff]
    %v91 = vld [vmem:[#allocation2 + $0x8] sm:$0xff]
    %v92 = vld [vmem:[#allocation2 + $0x10] sm:$0xff]
    %v93 = vld [vmem:[#allocation2 + $0x18] sm:$0xff]
    %v94 = vld [vmem:[#allocation2 + $0x20] sm:$0xff]
    %v95 = vld [vmem:[#allocation2 + $0x28] sm:$0xff]
    %v96 = vld [vmem:[#allocation2 + $0x30] sm:$0xff]
    %v97 = vld [vmem:[#allocation2 + $0x38] sm:$0xff]
    %v98 = vadd.f32 %v58, %v66
    %v99 = vadd.f32 %v98, %v74
    %v100 = vadd.f32 %v99, %v82
    %v101 = vadd.f32 %v59, %v67
    %v102 = vadd.f32 %v101, %v75
    %v103 = vadd.f32 %v102, %v83
    %v104 = vadd.f32 %v60, %v68
    %v105 = vadd.f32 %v104, %v76
    %v106 = vadd.f32 %v105, %v84
    %v107 = vadd.f32 %v61, %v69
    %v108 = vadd.f32 %v107, %v77
    %v109 = vadd.f32 %v108, %v85
    %v110 = vadd.f32 %v62, %v70
    %v111 = vadd.f32 %v110, %v78
    %v112 = vadd.f32 %v111, %v86
    %v113 = vadd.f32 %v63, %v71
    %v114 = vadd.f32 %v113, %v79
    %v115 = vadd.f32 %v114, %v87
    %v116 = vadd.f32 %v64, %v72
    %v117 = vadd.f32 %v116, %v80
    %v118 = vadd.f32 %v117, %v88
    %v119 = vadd.f32 %v65, %v73
    %v120 = vadd.f32 %v119, %v81
    %v121 = vadd.f32 %v120, %v89
    %v122 = vadd.f32 %v90, %v100
    %v123 = vadd.f32 %v91, %v103
    %v124 = vadd.f32 %v92, %v106
    %v125 = vadd.f32 %v93, %v109
    %v126 = vadd.f32 %v94, %v112
    %v127 = vadd.f32 %v95, %v115
    %v128 = vadd.f32 %v96, %v118
    %v129 = vadd.f32 %v97, %v121
    %130 = vst [vmem:[#allocation2] sm:$0xff] %v122
    %131 = vst [vmem:[#allocation2 + $0x8] sm:$0xff] %v123
    %132 = vst [vmem:[#allocation2 + $0x10] sm:$0xff] %v124
    %133 = vst [vmem:[#allocation2 + $0x18] sm:$0xff] %v125
    %134 = vst [vmem:[#allocation2 + $0x20] sm:$0xff] %v126
    %135 = vst [vmem:[#allocation2 + $0x28] sm:$0xff] %v127
    %136 = vst [vmem:[#allocation2 + $0x30] sm:$0xff] %v128
    %137 = vst [vmem:[#allocation2 + $0x38] sm:$0xff] %v129
    %v138 = vld [vmem:[#allocation3] sm:$0xff]
    %v139 = vld [vmem:[#allocation3 + $0x8] sm:$0xff]
    %v140 = vld [vmem:[#allocation3 + $0x10] sm:$0xff]
    %v141 = vld [vmem:[#allocation3 + $0x18] sm:$0xff]
    %v142 = vld [vmem:[#allocation3 + $0x20] sm:$0xff]
    %v143 = vld [vmem:[#allocation3 + $0x28] sm:$0xff]
    %v144 = vld [vmem:[#allocation3 + $0x30] sm:$0xff]
    %v145 = vld [vmem:[#allocation3 + $0x38] sm:$0xff]
    %v146 = vmul.f32 %v58, %v58
    %v147 = vmul.f32 %v59, %v59
    %v148 = vmul.f32 %v60, %v60
    %v149 = vmul.f32 %v61, %v61
    %v150 = vmul.f32 %v62, %v62
    %v151 = vmul.f32 %v63, %v63
    %v152 = vmul.f32 %v64, %v64
    %v153 = vmul.f32 %v65, %v65
    %v154 = vmul.f32 %v66, %v66
    %v155 = vmul.f32 %v67, %v67
    %v156 = vmul.f32 %v68, %v68
    %v157 = vmul.f32 %v69, %v69
    %v158 = vmul.f32 %v70, %v70
    %v159 = vmul.f32 %v71, %v71
    %v160 = vmul.f32 %v72, %v72
    %v161 = vmul.f32 %v73, %v73
    %v162 = vmul.f32 %v74, %v74
    %v163 = vmul.f32 %v75, %v75
    %v164 = vmul.f32 %v76, %v76
    %v165 = vmul.f32 %v77, %v77
    %v166 = vmul.f32 %v78, %v78
    %v167 = vmul.f32 %v79, %v79
    %v168 = vmul.f32 %v80, %v80
    %v169 = vmul.f32 %v81, %v81
    %v170 = vmul.f32 %v82, %v82
    %v171 = vmul.f32 %v83, %v83
    %v172 = vmul.f32 %v84, %v84
    %v173 = vmul.f32 %v85, %v85
    %v174 = vmul.f32 %v86, %v86
    %v175 = vmul.f32 %v87, %v87
    %v176 = vmul.f32 %v88, %v88
    %v177 = vmul.f32 %v89, %v89
    %v178 = vadd.f32 %v146, %v154
    %v179 = vadd.f32 %v178, %v162
    %v180 = vadd.f32 %v179, %v170
    %v181 = vadd.f32 %v147, %v155
    %v182 = vadd.f32 %v181, %v163
    %v183 = vadd.f32 %v182, %v171
    %v184 = vadd.f32 %v148, %v156
    %v185 = vadd.f32 %v184, %v164
    %v186 = vadd.f32 %v185, %v172
    %v187 = vadd.f32 %v149, %v157
    %v188 = vadd.f32 %v187, %v165
    %v189 = vadd.f32 %v188, %v173
    %v190 = vadd.f32 %v150, %v158
    %v191 = vadd.f32 %v190, %v166
    %v192 = vadd.f32 %v191, %v174
    %v193 = vadd.f32 %v151, %v159
    %v194 = vadd.f32 %v193, %v167
    %v195 = vadd.f32 %v194, %v175
    %v196 = vadd.f32 %v152, %v160
    %v197 = vadd.f32 %v196, %v168
    %v198 = vadd.f32 %v197, %v176
    %v199 = vadd.f32 %v153, %v161
    %v200 = vadd.f32 %v199, %v169
    %v201 = vadd.f32 %v200, %v177
    %v202 = vadd.f32 %v138, %v180
    %v203 = vadd.f32 %v139, %v183
    %v204 = vadd.f32 %v140, %v186
    %v205 = vadd.f32 %v141, %v189
    %v206 = vadd.f32 %v142, %v192
    %v207 = vadd.f32 %v143, %v195
    %v208 = vadd.f32 %v144, %v198
    %v209 = vadd.f32 %v145, %v201
    %210 = vst [vmem:[#allocation3] sm:$0xff] %v202
    %211 = vst [vmem:[#allocation3 + $0x8] sm:$0xff] %v203
    %212 = vst [vmem:[#allocation3 + $0x10] sm:$0xff] %v204
    %213 = vst [vmem:[#allocation3 + $0x18] sm:$0xff] %v205
    %214 = vst [vmem:[#allocation3 + $0x20] sm:$0xff] %v206
    %215 = vst [vmem:[#allocation3 + $0x28] sm:$0xff] %v207
    %216 = vst [vmem:[#allocation3 + $0x30] sm:$0xff] %v208
    %217 = vst [vmem:[#allocation3 + $0x38] sm:$0xff] %v209
    // Predicated region
    $region30: #{tpu_custom_call.1} parent=1 // pred_check
      %p218 = pneg %p38
    $region31: #{tpu_custom_call.1} parent=1 // pred_check_branch
      %220 = sbr.rel (%p218) target = $region33
    $region32: #{tpu_custom_call.1} parent=1 // pred_region
      %v221 = vld [vmem:[#allocation2] sm:$0xff]
      %v222 = vld [vmem:[#allocation2 + $0x8] sm:$0xff]
      %v223 = vld [vmem:[#allocation2 + $0x10] sm:$0xff]
      %v224 = vld [vmem:[#allocation2 + $0x18] sm:$0xff]
      %v225 = vld [vmem:[#allocation2 + $0x20] sm:$0xff]
      %v226 = vld [vmem:[#allocation2 + $0x28] sm:$0xff]
      %v227 = vld [vmem:[#allocation2 + $0x30] sm:$0xff]
      %v228 = vld [vmem:[#allocation2 + $0x38] sm:$0xff]
      %v229 = vadd.f32 %v221, %v222
      %v230 = vadd.f32 %v229, %v223
      %v231 = vadd.f32 %v230, %v224
      %232 = vadd.xlane.f32.xlu0 %v231
      %v233 = vpop.xlane.xlu0 %232
      %v234 = vadd.f32 %v225, %v226
      %v235 = vadd.f32 %v234, %v227
      %v236 = vadd.f32 %v235, %v228
      %237 = vadd.xlane.f32.xlu0 %v236
      %v238 = vpop.xlane.xlu0 %237
      %v239 = vmul.f32 %v233, 0.00048828125
      %v240 = vmul.f32 %v238, 0.00048828125
      %v241 = vld [vmem:[#allocation3] sm:$0xff]
      %v242 = vld [vmem:[#allocation3 + $0x8] sm:$0xff]
      %v243 = vld [vmem:[#allocation3 + $0x10] sm:$0xff]
      %v244 = vld [vmem:[#allocation3 + $0x18] sm:$0xff]
      %v245 = vld [vmem:[#allocation3 + $0x20] sm:$0xff]
      %v246 = vld [vmem:[#allocation3 + $0x28] sm:$0xff]
      %v247 = vld [vmem:[#allocation3 + $0x30] sm:$0xff]
      %v248 = vld [vmem:[#allocation3 + $0x38] sm:$0xff]
      %v249 = vadd.f32 %v241, %v242
      %v250 = vadd.f32 %v249, %v243
      %v251 = vadd.f32 %v250, %v244
      %252 = vadd.xlane.f32.xlu0 %v251
      %v253 = vpop.xlane.xlu0 %252
      %v254 = vadd.f32 %v245, %v246
      %v255 = vadd.f32 %v254, %v247
      %v256 = vadd.f32 %v255, %v248
      %257 = vadd.xlane.f32.xlu0 %v256
      %v258 = vpop.xlane.xlu0 %257
      %v259 = vmul.f32 %v253, 0.00048828125
      %v260 = vmul.f32 %v258, 0.00048828125
      %v261 = vmul.f32 %v239, %v239
      %v262 = vmul.f32 %v240, %v240
      %v263 = vsub.f32 %v259, %v261
      %v264 = vsub.f32 %v260, %v262
      %v265 = vmax.f32 %v263, 0.0
      %v266 = vmax.f32 %v264, 0.0
      %v267 = vld [vmem:[%s1] sm:$0xff]
      %v268 = vld [vmem:[%s1 + $0x8] sm:$0xff]
      %v269 = vadd.f32 %v265, 1e-05
      %v270 = vadd.f32 %v266, 1e-05
      %v271 = vrsqrt.pop %v269
      %v272 = vrsqrt.pop %v270
      %v273 = vmul.f32 %v267, %v271
      %v274 = vmul.f32 %v268, %v272
      %v275 = vld [vmem:[%s2] sm:$0xff]
      %v276 = vld [vmem:[%s2 + $0x8] sm:$0xff]
      %v277 = vmul.f32 %v239, %v273
      %v278 = vmul.f32 %v240, %v274
      %v279 = vsub.f32 %v275, %v277
      %v280 = vsub.f32 %v276, %v278
      %v281 = vld [vmem:[%s3] sm:$0xff]
      %v282 = vld [vmem:[%s3 + $0x8] sm:$0xff]
      %284 = vset.pattern.permute.xlu0 0
      %285 = vperm.xlu0 %284, %v273
      %v286 = vpop.permute.xlu0 %285
      %289 = vset.pattern.permute.xlu0 0
      %290 = vperm.xlu0 %289, %v274
      %v291 = vpop.permute.xlu0 %290
      %v293 = vmul.f32 %v281, %v286
      %v294 = vmul.f32 %v282, %v291
      %v295 = vpack.c.bf16 %v294, %v293
      %v297 = vunpack.c.l.b16 %v295
      %v298 = vunpack.c.h.b16 %v295
      %v299 = vpack.c.b16 %v297, %v297
      %v300 = vpack.c.b16 %v298, %v298
      %303 = vst [vmem:[#allocation7] sm:$0xf] %v299
      %304 = vst [vmem:[#allocation7 + $0x4] sm:$0xf] %v300
      %v305 = vld [vmem:[%s4] sm:$0x1]
      %307 = vset.pattern.permute.xlu0 0
      %308 = vperm.xlu0 %307, %v279
      %v309 = vpop.permute.xlu0 %308
      %312 = vset.pattern.permute.xlu0 0
      %313 = vperm.xlu0 %312, %v280
      %v314 = vpop.permute.xlu0 %313
      %v316 = vmul.f32 %v281, %v309
      %v317 = vmul.f32 %v282, %v314
      %v318 = vadd.f32 %v316, %v317
      %v319 = vrot.slane %v318, 4
      %v320 = vadd.f32 %v318, %v319
      %v321 = vrot.slane %v320, 2
      %v322 = vadd.f32 %v320, %v321
      %v323 = vrot.slane %v322, 1
      %v324 = vadd.f32 %v322, %v323
      %v325 = vadd.f32 %v305, %v324
      %326 = vst [vmem:[#allocation8] sm:$0x1] %v325
    $region33: #{tpu_custom_call.1} parent=1 // pred_fallthru
      _
    // Predicated region
    $region34: #{tpu_custom_call.1} parent=1 // pred_check
      _
    $region35: #{tpu_custom_call.1} parent=1 // pred_check_branch
      %328 = sbr.rel (0) target = $region37
    $region36: #{tpu_custom_call.1} parent=1 // pred_region
      %s330 = ssub.s32 128, 128
      %331 = vsyncadd [#allocation6], %s330
      %s332 = sshll.u32 [#allocation7], 4
      %s333 = int_to_ptr.vmem [resolvable:$true] %s332
      %338 = dma.vmem_to_hbm [thread:$0]  %s333, 128, %s5, [#allocation6], 64, 64, 4
    $region37: #{tpu_custom_call.1} parent=1 // pred_fallthru
      _
    // Predicated region
    $region38: #{tpu_custom_call.1} parent=1 // pred_check
      _
    $region39: #{tpu_custom_call.1} parent=1 // pred_check_branch
      %340 = sbr.rel (0) target = $region41
    $region40: #{tpu_custom_call.1} parent=1 // pred_region
      %s342 = ssub.s32 16, 16
      %343 = vsyncadd [#allocation9], %s342
      %s345 = sshll.u32 [#allocation8], 4
      %s346 = int_to_ptr.vmem [resolvable:$true] %s345
      %348 = dma.vmem_to_hbm [thread:$0]  %s346, 16, %s6, [#allocation9]
    $region41: #{tpu_custom_call.1} parent=1 // pred_fallthru
      _
    // Predicated region
    $region42: #{tpu_custom_call.1} parent=1 // pred_check
      _
    $region43: #{tpu_custom_call.1} parent=1 // pred_check_branch
      %350 = sbr.rel (0) target = $region45
    $region44: #{tpu_custom_call.1} parent=1 // pred_region
      %351 = dma.done [#allocation6], 128
    $region45: #{tpu_custom_call.1} parent=1 // pred_fallthru
      _
    // Predicated region
    $region46: #{tpu_custom_call.1} parent=1 // pred_check
      _
    $region47: #{tpu_custom_call.1} parent=1 // pred_check_branch
      %353 = sbr.rel (0) target = $region49
    $region48: #{tpu_custom_call.1} parent=1 // pred_region
      %354 = dma.done [#allocation9], 16
    $region49: #{tpu_custom_call.1} parent=1 // pred_fallthru
      _
    %355 = vsyncpa [#allocation5], 1
    %356 = vsyncpa [#allocation6], 1
    %357 = vsyncpa [#allocation9], 1

</llo_original>
